<compile_context>
chip_gen: v6e
topology: v6e:2x2x1
jax: 0.10.0
libtpu: 0.0.40
codegen_flags: <defaults>
</compile_context>

<pallas_src>
import functools

import jax
import jax.numpy as jnp
from jax import lax
from jax.experimental import pallas as pl
from jax.experimental.pallas import tpu as pltpu


def _round_up(x: int, m: int) -> int:
    return ((x + m - 1) // m) * m


def _pad2(a, rows: int, cols: int):
    pr = rows - a.shape[0]
    pc = cols - a.shape[1]
    if pr == 0 and pc == 0:
        return a
    return jnp.pad(a, ((0, pr), (0, pc)))


def _sparse_layer_kernel(*refs, has_bias: bool, has_pre: bool):
    # refs = (x_ref, w_ref, [b_ref], [pre_ref], o_ref, acc_ref)
    x_ref, w_ref = refs[0], refs[1]
    idx = 2
    b_ref = refs[idx] if has_bias else None
    idx += int(has_bias)
    pre_ref = refs[idx] if has_pre else None
    idx += int(has_pre)
    o_ref, acc_ref = refs[idx], refs[idx + 1]

    k = pl.program_id(2)

    @pl.when(k == 0)
    def _():
        acc_ref[...] = jnp.zeros_like(acc_ref)

    # x_ref: [tm, tk], w_ref: [tn, tk] (native nn.Linear layout) -> contract on K.
    acc_ref[...] += lax.dot_general(
        x_ref[...],
        w_ref[...],
        dimension_numbers=(((1,), (1,)), ((), ())),
        preferred_element_type=jnp.float32,
    )

    # Epilogue exactly once per output tile, in f32 on the accumulator.
    @pl.when(k == pl.num_programs(2) - 1)
    def _():
        out = acc_ref[...]
        if has_bias:
            out = out + b_ref[...]                       # [1, tn] broadcasts over rows
        if has_pre:
            out = out + pre_ref[...].astype(jnp.float32)
        o_ref[...] = jnp.maximum(out, 0.0).astype(o_ref.dtype)


@functools.partial(
    jax.jit, static_argnames=("block_m", "block_n", "block_k", "compute_dtype")
)
def sparse_layer(
    x,
    weight,
    bias=None,
    pre_code=None,
    *,
    block_m: int = 256,
    block_n: int = 256,
    block_k: int = 512,
    compute_dtype=None,
):
    """Pallas implementation of SparseLayer.forward.

    x:        [B, in_features]
    weight:   [latent_dim, in_features]   (native PyTorch nn.Linear layout — no transpose)
    bias:     [latent_dim] or None        (None == Linear(bias=False))
    pre_code: [B, latent_dim] or None
    returns:  [B, latent_dim] = relu(x @ weight.T + bias [+ pre_code])
    """
    B, K = x.shape
    N, Kw = weight.shape
    assert Kw == K
    out_dtype = x.dtype

    # Tile sizes: clamp to the (8,128)-aligned padded problem size.
    tm = min(block_m, _round_up(B, 8))
    tn = min(block_n, _round_up(N, 128))
    tk = min(block_k, _round_up(K, 128))
    Mp, Np, Kp = _round_up(B, tm), _round_up(N, tn), _round_up(K, tk)

    if compute_dtype is not None:
        x = x.astype(compute_dtype)
        weight = weight.astype(compute_dtype)

    xp = _pad2(x, Mp, Kp)            # [Mp, Kp]
    wp = _pad2(weight, Np, Kp)       # [Np, Kp]  (K-padding contributes zeros)

    has_bias = bias is not None
    has_pre = pre_code is not None

    in_specs = [
        pl.BlockSpec((tm, tk), lambda i, j, k: (i, k)),   # x tile
        pl.BlockSpec((tn, tk), lambda i, j, k: (j, k)),   # weight tile (untransposed)
    ]
    inputs = [xp, wp]
    if has_bias:
        b2d = _pad2(bias.reshape(1, N).astype(jnp.float32), 1, Np)
        in_specs.append(pl.BlockSpec((1, tn), lambda i, j, k: (0, j)))
        inputs.append(b2d)
    if has_pre:
        prep = _pad2(pre_code, Mp, Np)
        in_specs.append(pl.BlockSpec((tm, tn), lambda i, j, k: (i, j)))
        inputs.append(prep)

    grid = (Mp // tm, Np // tn, Kp // tk)

    bytes_accessed = (
        xp.size * xp.dtype.itemsize
        + wp.size * wp.dtype.itemsize
        + Mp * Np * jnp.dtype(out_dtype).itemsize
        + (prep.size * prep.dtype.itemsize if has_pre else 0)
        + (Np * 4 if has_bias else 0)
    )

    out = pl.pallas_call(
        functools.partial(_sparse_layer_kernel, has_bias=has_bias, has_pre=has_pre),
        out_shape=jax.ShapeDtypeStruct((Mp, Np), out_dtype),
        grid_spec=pltpu.PrefetchScalarGridSpec(
            num_scalar_prefetch=0,
            grid=grid,
            in_specs=in_specs,
            out_specs=pl.BlockSpec((tm, tn), lambda i, j, k: (i, j)),
            scratch_shapes=[pltpu.VMEM((tm, tn), jnp.float32)],
        ),
        compiler_params=pltpu.CompilerParams(
            dimension_semantics=("parallel", "parallel", "arbitrary")
        ),
        cost_estimate=pl.CostEstimate(
            flops=2 * Mp * Np * Kp,
            transcendentals=0,
            bytes_accessed=bytes_accessed,
        ),
    )(*inputs)

    if Mp != B or Np != N:
        out = out[:B, :N]
    return out


def _reference(x, weight, bias, pre_code):
    code = lax.dot_general(
        x, weight, (((1,), (1,)), ((), ())), precision=lax.Precision.HIGHEST
    )
    if bias is not None:
        code = code + bias
    if pre_code is not None:
        code = code + pre_code
    return jnp.maximum(code, 0.0)


if __name__ == "__main__":
    # Small shapes consistent with the module's forward: x is [batch, in_features].
    B, in_features, latent_dim = 24, 256, 384

    key = jax.random.PRNGKey(0)
    kx, kw, kb, kp = jax.random.split(key, 4)
    x = jax.random.normal(kx, (B, in_features), dtype=jnp.float32)
    weight = jax.random.normal(kw, (latent_dim, in_features), dtype=jnp.float32) * 0.1
    bias = jax.random.normal(kb, (latent_dim,), dtype=jnp.float32) * 0.1
    pre_code = jax.random.normal(kp, (B, latent_dim), dtype=jnp.float32) * 0.1

    tol = dict(atol=2e-2, rtol=2e-2)

    # 1) Multi-tile grid (3, 3, 2): exercises the K accumulator + epilogue once per tile.
    out1 = sparse_layer(x, weight, bias, pre_code, block_m=8, block_n=128, block_k=128)
    jax.block_until_ready(out1)
    assert jnp.allclose(out1, _reference(x, weight, bias, pre_code), **tol), "mismatch (tiled, pre_code)"

    # 2) Default (larger) tiles, no pre_code, N padded to the tile multiple.
    out2 = sparse_layer(x, weight, bias, None)
    jax.block_until_ready(out2)
    assert jnp.allclose(out2, _reference(x, weight, bias, None), **tol), "mismatch (no pre_code)"

    # 3) True no-bias variant (Linear(bias=False)).
    out3 = sparse_layer(x, weight, None, None)
    jax.block_until_ready(out3)
    assert jnp.allclose(out3, _reference(x, weight, None, None), **tol), "mismatch (no bias)"

    # 4) Ragged shapes -> exercises the padding / slice-back path.
    B2, K2, N2 = 10, 96, 48
    k1, k2, k3, k4 = jax.random.split(jax.random.PRNGKey(1), 4)
    x2 = jax.random.normal(k1, (B2, K2), dtype=jnp.float32)
    w2 = jax.random.normal(k2, (N2, K2), dtype=jnp.float32) * 0.1
    b2 = jax.random.normal(k3, (N2,), dtype=jnp.float32) * 0.1
    p2 = jax.random.normal(k4, (B2, N2), dtype=jnp.float32) * 0.1
    out4 = sparse_layer(x2, w2, b2, p2)
    jax.block_until_ready(out4)
    assert out4.shape == (B2, N2)
    assert jnp.allclose(out4, _reference(x2, w2, b2, p2), **tol), "mismatch (ragged/padded)"

    print("KERNEL_OK")
</pallas_src>

<mosaic_0001>
module attributes {stable_mosaic.version = 11 : i64} {
  func.func @_sparse_layer_kernel(%arg0: i32, %arg1: i32, %arg2: i32, %arg3: memref<8x128xf32, #tpu.memory_space<vmem>>, %arg4: memref<128x128xf32, #tpu.memory_space<vmem>>, %arg5: memref<1x128xf32, #tpu.memory_space<vmem>>, %arg6: memref<8x128xf32, #tpu.memory_space<vmem>>, %arg7: memref<8x128xf32, #tpu.memory_space<vmem>>, %arg8: memref<8x128xf32, #tpu.memory_space<vmem>>) attributes {dimension_semantics = [#tpu.dimension_semantics<parallel>, #tpu.dimension_semantics<parallel>, #tpu.dimension_semantics<arbitrary>], iteration_bounds = array<i64: 3, 3, 2>, scalar_prefetch = 0 : i64, scratch_operands = 1 : i64, tpu.core_type = #tpu.core_type<tc>, window_params = [{transform_indices = @transform_0, window_bounds = array<i64: 8, 128>}, {transform_indices = @transform_1, window_bounds = array<i64: 128, 128>}, {transform_indices = @transform_2, window_bounds = array<i64: 1, 128>}, {transform_indices = @transform_3, window_bounds = array<i64: 8, 128>}, {transform_indices = @transform_4, window_bounds = array<i64: 8, 128>}]} {
    %c0_i32 = arith.constant 0 : i32
    %0 = arith.cmpi eq, %arg2, %c0_i32 : i32
    %1 = arith.extui %0 : i1 to i32
    %c0_i32_0 = arith.constant 0 : i32
    %2 = arith.cmpi ne, %1, %c0_i32_0 : i32
    scf.if %2 {
      %cst_9 = arith.constant 0.000000e+00 : f32
      %12 = vector.broadcast %cst_9 : f32 to vector<8x128xf32>
      %c0_10 = arith.constant 0 : index
      %c0_11 = arith.constant 0 : index
      %13 = vector.load %arg8[%c0_10, %c0_11] : memref<8x128xf32, #tpu.memory_space<vmem>>, vector<8x128xf32>
      tpu.vector_store %arg8[%c0_10, %c0_11], %12 {strides = array<i32>} : memref<8x128xf32, #tpu.memory_space<vmem>>, vector<8x128xf32>,
    } else {
    }
    %c0 = arith.constant 0 : index
    %c0_1 = arith.constant 0 : index
    %3 = vector.load %arg8[%c0, %c0_1] : memref<8x128xf32, #tpu.memory_space<vmem>>, vector<8x128xf32>
    %c0_2 = arith.constant 0 : index
    %c0_3 = arith.constant 0 : index
    %4 = vector.load %arg3[%c0_2, %c0_3] : memref<8x128xf32, #tpu.memory_space<vmem>>, vector<8x128xf32>
    %c0_4 = arith.constant 0 : index
    %c0_5 = arith.constant 0 : index
    %5 = vector.load %arg4[%c0_4, %c0_5] : memref<128x128xf32, #tpu.memory_space<vmem>>, vector<128x128xf32>
    %cst = arith.constant dense<0.000000e+00> : vector<8x128xf32>
    %6 = tpu.matmul %4, %5, %cst {dimension_numbers = #tpu.dot_dimension_numbers<[1], [1], [0], [0], [0, 0, 1, 0], [], []>} : vector<8x128xf32>, vector<128x128xf32>, vector<8x128xf32> -> vector<8x128xf32>
    %7 = arith.addf %3, %6 : vector<8x128xf32>
    %c0_6 = arith.constant 0 : index
    %c0_7 = arith.constant 0 : index
    %8 = vector.load %arg8[%c0_6, %c0_7] : memref<8x128xf32, #tpu.memory_space<vmem>>, vector<8x128xf32>
    tpu.vector_store %arg8[%c0_6, %c0_7], %7 {strides = array<i32>} : memref<8x128xf32, #tpu.memory_space<vmem>>, vector<8x128xf32>,
    %c1_i32 = arith.constant 1 : i32
    %9 = arith.cmpi eq, %arg2, %c1_i32 : i32
    %10 = arith.extui %9 : i1 to i32
    %c0_i32_8 = arith.constant 0 : i32
    %11 = arith.cmpi ne, %10, %c0_i32_8 : i32
    scf.if %11 {
      %c0_9 = arith.constant 0 : index
      %c0_10 = arith.constant 0 : index
      %12 = vector.load %arg8[%c0_9, %c0_10] : memref<8x128xf32, #tpu.memory_space<vmem>>, vector<8x128xf32>
      %c0_11 = arith.constant 0 : index
      %c0_12 = arith.constant 0 : index
      %13 = vector.load %arg5[%c0_11, %c0_12] : memref<1x128xf32, #tpu.memory_space<vmem>>, vector<1x128xf32>
      %14 = vector.broadcast %13 : vector<1x128xf32> to vector<8x128xf32>
      %15 = arith.addf %12, %14 : vector<8x128xf32>
      %c0_13 = arith.constant 0 : index
      %c0_14 = arith.constant 0 : index
      %16 = vector.load %arg6[%c0_13, %c0_14] : memref<8x128xf32, #tpu.memory_space<vmem>>, vector<8x128xf32>
      %17 = arith.addf %15, %16 : vector<8x128xf32>
      %cst_15 = arith.constant 0.000000e+00 : f32
      %18 = vector.broadcast %cst_15 : f32 to vector<8x128xf32>
      %19 = arith.maximumf %17, %18 : vector<8x128xf32>
      %c0_16 = arith.constant 0 : index
      %c0_17 = arith.constant 0 : index
      %20 = vector.load %arg7[%c0_16, %c0_17] : memref<8x128xf32, #tpu.memory_space<vmem>>, vector<8x128xf32>
      tpu.vector_store %arg7[%c0_16, %c0_17], %19 {strides = array<i32>} : memref<8x128xf32, #tpu.memory_space<vmem>>, vector<8x128xf32>,
    } else {
    }
    return
  }
  func.func @transform_0(%arg0: i32, %arg1: i32, %arg2: i32) -> (i32, i32) {
    %c0_i32 = arith.constant 0 : i32
    return %arg0, %arg2 : i32, i32
  }
  func.func @transform_1(%arg0: i32, %arg1: i32, %arg2: i32) -> (i32, i32) {
    %c0_i32 = arith.constant 0 : i32
    return %arg1, %arg2 : i32, i32
  }
  func.func @transform_2(%arg0: i32, %arg1: i32, %arg2: i32) -> (i32, i32) {
    %c0_i32 = arith.constant 0 : i32
    %c0_i32_0 = arith.constant 0 : i32
    return %c0_i32, %arg1 : i32, i32
  }
  func.func @transform_3(%arg0: i32, %arg1: i32, %arg2: i32) -> (i32, i32) {
    %c0_i32 = arith.constant 0 : i32
    return %arg0, %arg1 : i32, i32
  }
  func.func @transform_4(%arg0: i32, %arg1: i32, %arg2: i32) -> (i32, i32) {
    %c0_i32 = arith.constant 0 : i32
    return %arg0, %arg1 : i32, i32
  }
}

</mosaic_0001>

<llo_original>
// kernel: sparse_layer.1
$region0: #{sparse_layer.1}
  #allocation0 [shape = 'u32[]', space=smem, size = 0x4, offset = 0x4, fixed_abs, tag = 'smem constant byte address 0x4 - core index']
  #allocation1 [shape = 'u32[144,128]{1,0:T(1,128)}', space=vmem, size = 0x12000, scoped, tag = 'internal scratch']
  #allocation2 [shape = 'f32[8,128]{1,0:T(8,128)}', space=vmem, size = 0x1000, scoped, tag = 'scratch operand']
  %s0 = inlined_call_operand.hbm [shape: f32[24,256], index: 0, kind: input, shape index: {}]
  %s1 = inlined_call_operand.hbm [shape: f32[384,256], index: 1, kind: input, shape index: {}]
  %s2 = inlined_call_operand.vmem [shape: f32[1,384], index: 2, kind: input, shape index: {}]
  %s3 = inlined_call_operand.hbm [shape: f32[24,384], index: 3, kind: input, shape index: {}]
  %s4 = inlined_call_operand.hbm [shape: f32[24,384], index: 4, kind: output, shape index: {}]
  %s5 = sld [smem:[#allocation0]]
  $region69: #{sparse_layer.1} parent=0
    _
  %s7 = ssub.s32 1, %s5
  %s8 = scalar_select 0, %s7, %s5
  $region1: #{sparse_layer.1} parent=0
    #allocation3 [shape = 'u8[8192]{0}', space=vmem, size = 0x2000, scoped, tag = 'input window, operand 0']
    #allocation4 [shape = 's32[2]{0}', space=sflag, size = 0x8, scoped, tag = 'scoped memory for sparse_layer.1']
    #allocation5 [shape = 's32[2]{0}', space=sflag, size = 0x8, scoped, tag = 'scoped memory for sparse_layer.1']
    #allocation6 [shape = 'u8[131072]{0}', space=vmem, size = 0x20000, scoped, tag = 'input window, operand 1']
    #allocation7 [shape = 's32[2]{0}', space=sflag, size = 0x8, scoped, tag = 'scoped memory for sparse_layer.1']
    #allocation8 [shape = 'u8[8192]{0}', space=vmem, size = 0x2000, scoped, tag = 'input window, operand 3']
    #allocation9 [shape = 'u8[8192]{0}', space=vmem, size = 0x2000, scoped, tag = 'output window, operand 0']
    %9 = vsyncpa [#allocation4], 0
    %s10 = scalar_lea.sflag [#allocation4], 1
    %11 = vsyncpa %s10, 0
    %12 = vsyncpa [#allocation7], 0
    %s13 = scalar_lea.sflag [#allocation7], 1
    %14 = vsyncpa %s13, 0
    %15 = vsyncpa [#allocation5], 0
    %s16 = scalar_lea.sflag [#allocation5], 1
    %17 = vsyncpa %s16, 0
    loop: start=0, step=1, limit=20
    $region2: #{sparse_layer.1} parent=1 // loop_pre_header
      _
    $region3: #{sparse_layer.1} parent=1 // loop_header
      %s19 = sphi 0, %s23
      %p20 = scmp.ge.s32.totalorder %s19, 20
      %s26 = sphi 0, %s45
      %s27 = sphi 0, %s41
      %s28 = sphi 0, %s37
      %s29 = sphi 0, %s26
      %s30 = sphi 0, %s27
      %s31 = sphi 0, %s28
      %s32 = sphi 0, %s29
      %s33 = sphi 0, %s30
      %s34 = sphi 0, %s31
      %s50 = sphi 0, %s52
      %s53 = sphi 0, %s50
      %s54 = sphi 0, %s53
      %s70 = sphi 0, %s54
      %s78 = sphi 0, %s80
      %s81 = sphi 0, %s78
      %s82 = sphi 0, %s81
      %s98 = sphi 0, %s82
      %s104 = sphi 0, %s106
      %s107 = sphi 0, %s104
      %s108 = sphi 0, %s107
      %s124 = sphi 0, %s108
      %s132 = sphi 0, %s134
      %s135 = sphi 0, %s132
      %s136 = sphi 0, %s135
      %s152 = sphi 0, %s136
      %s160 = sphi 0, %s162
      %s163 = sphi 0, %s160
      %s164 = sphi 0, %s163
      %s180 = sphi 0, %s164
    $region4: #{sparse_layer.1} parent=1 // loop_header_branch
      %22 = sbr.rel (%p20) target = $region8
    $region5: #{sparse_layer.1} parent=1 // loop_body
      %s24 = ssub.s32 %s19, 1
      %s25 = ssub.s32 %s19, 2
      %s35 = sadd.s32 1, %s28
      %p36 = scmp.ge.s32.totalorder %s35, 2
      %s37 = scalar_select %p36, 0, %s35
      %s38 = sadd.s32 1, %s27
      %s39 = scalar_select %p36, %s38, %s27
      %p40 = scmp.ge.s32.totalorder %s39, 3
      %s41 = scalar_select %p40, 0, %s39
      %s42 = sadd.s32 1, %s26
      %s43 = scalar_select %p40, %s42, %s26
      %p44 = scmp.ge.s32.totalorder %s43, 3
      %s45 = scalar_select %p44, 0, %s43
      %s46 = ssub.s32 %s26, %s45
      %s47 = ssub.s32 %s28, %s37
      %s48 = sor.u32 %s46, %s47
      %p49 = scmp.eq.s32.totalorder %s48, 0
      %s51 = sadd.s32 %s50, 1
      %s52 = scalar_select %p49, %s50, %s51
      %p55 = pneg %p49
      %p56 = scmp.eq.s32.totalorder %s19, 17
      %p57 = por %p55, %p56
      %p58 = scmp.ne.s32.totalorder %s50, %s53
      %p59 = scmp.eq.s32.totalorder %s19, 0
      %p60 = por %p58, %p59
      %p61 = scmp.ne.s32.totalorder %s50, %s53
      %p62 = scmp.eq.s32.totalorder %s24, 17
      %p63 = por %p61, %p62
      %p64 = scmp.ne.s32.totalorder %s53, %s54
      %p65 = scmp.eq.s32.totalorder %s24, 0
      %p66 = por %p64, %p65
      %p67 = scmp.ne.s32.totalorder %s53, %s54
      %p68 = scmp.eq.s32.totalorder %s25, 17
      %p69 = por %p67, %p68
      %p71 = scmp.ne.s32.totalorder %s54, %s70
      %p72 = scmp.eq.s32.totalorder %s25, 0
      %p73 = por %p71, %p72
      %s74 = ssub.s32 %s27, %s41
      %s75 = ssub.s32 %s28, %s37
      %s76 = sor.u32 %s74, %s75
      %p77 = scmp.eq.s32.totalorder %s76, 0
      %s79 = sadd.s32 %s78, 1
      %s80 = scalar_select %p77, %s78, %s79
      %p83 = pneg %p77
      %p84 = scmp.eq.s32.totalorder %s19, 17
      %p85 = por %p83, %p84
      %p86 = scmp.ne.s32.totalorder %s78, %s81
      %p87 = scmp.eq.s32.totalorder %s19, 0
      %p88 = por %p86, %p87
      %p89 = scmp.ne.s32.totalorder %s78, %s81
      %p90 = scmp.eq.s32.totalorder %s24, 17
      %p91 = por %p89, %p90
      %p92 = scmp.ne.s32.totalorder %s81, %s82
      %p93 = scmp.eq.s32.totalorder %s24, 0
      %p94 = por %p92, %p93
      %p95 = scmp.ne.s32.totalorder %s81, %s82
      %p96 = scmp.eq.s32.totalorder %s25, 17
      %p97 = por %p95, %p96
      %p99 = scmp.ne.s32.totalorder %s82, %s98
      %p100 = scmp.eq.s32.totalorder %s25, 0
      %p101 = por %p99, %p100
      %s102 = ssub.s32 %s27, %s41
      %p103 = scmp.eq.s32.totalorder %s102, 0
      %s105 = sadd.s32 %s104, 1
      %s106 = scalar_select %p103, %s104, %s105
      %p109 = pneg %p103
      %p110 = scmp.eq.s32.totalorder %s19, 17
      %p111 = por %p109, %p110
      %p112 = scmp.ne.s32.totalorder %s104, %s107
      %p113 = scmp.eq.s32.totalorder %s19, 0
      %p114 = por %p112, %p113
      %p115 = scmp.ne.s32.totalorder %s104, %s107
      %p116 = scmp.eq.s32.totalorder %s24, 17
      %p117 = por %p115, %p116
      %p118 = scmp.ne.s32.totalorder %s107, %s108
      %p119 = scmp.eq.s32.totalorder %s24, 0
      %p120 = por %p118, %p119
      %p121 = scmp.ne.s32.totalorder %s107, %s108
      %p122 = scmp.eq.s32.totalorder %s25, 17
      %p123 = por %p121, %p122
      %p125 = scmp.ne.s32.totalorder %s108, %s124
      %p126 = scmp.eq.s32.totalorder %s25, 0
      %p127 = por %p125, %p126
      %s128 = ssub.s32 %s26, %s45
      %s129 = ssub.s32 %s27, %s41
      %s130 = sor.u32 %s128, %s129
      %p131 = scmp.eq.s32.totalorder %s130, 0
      %s133 = sadd.s32 %s132, 1
      %s134 = scalar_select %p131, %s132, %s133
      %p137 = pneg %p131
      %p138 = scmp.eq.s32.totalorder %s19, 17
      %p139 = por %p137, %p138
      %p140 = scmp.ne.s32.totalorder %s132, %s135
      %p141 = scmp.eq.s32.totalorder %s19, 0
      %p142 = por %p140, %p141
      %p143 = scmp.ne.s32.totalorder %s132, %s135
      %p144 = scmp.eq.s32.totalorder %s24, 17
      %p145 = por %p143, %p144
      %p146 = scmp.ne.s32.totalorder %s135, %s136
      %p147 = scmp.eq.s32.totalorder %s24, 0
      %p148 = por %p146, %p147
      %p149 = scmp.ne.s32.totalorder %s135, %s136
      %p150 = scmp.eq.s32.totalorder %s25, 17
      %p151 = por %p149, %p150
      %p153 = scmp.ne.s32.totalorder %s136, %s152
      %p154 = scmp.eq.s32.totalorder %s25, 0
      %p155 = por %p153, %p154
      %s156 = ssub.s32 %s26, %s45
      %s157 = ssub.s32 %s27, %s41
      %s158 = sor.u32 %s156, %s157
      %p159 = scmp.eq.s32.totalorder %s158, 0
      %s161 = sadd.s32 %s160, 1
      %s162 = scalar_select %p159, %s160, %s161
      %p165 = pneg %p159
      %p166 = scmp.eq.s32.totalorder %s19, 17
      %p167 = por %p165, %p166
      %p168 = scmp.ne.s32.totalorder %s160, %s163
      %p169 = scmp.eq.s32.totalorder %s19, 0
      %p170 = por %p168, %p169
      %p171 = scmp.ne.s32.totalorder %s160, %s163
      %p172 = scmp.eq.s32.totalorder %s24, 17
      %p173 = por %p171, %p172
      %p174 = scmp.ne.s32.totalorder %s163, %s164
      %p175 = scmp.eq.s32.totalorder %s24, 0
      %p176 = por %p174, %p175
      %p177 = scmp.ne.s32.totalorder %s163, %s164
      %p178 = scmp.eq.s32.totalorder %s25, 17
      %p179 = por %p177, %p178
      %p181 = scmp.ne.s32.totalorder %s164, %s180
      %p182 = scmp.eq.s32.totalorder %s25, 0
      %p183 = por %p181, %p182
      %p184 = scmp.le.s32.totalorder 1, %s19
      %p185 = scmp.lt.s32.totalorder %s19, 19
      %p186 = pnand %p184, %p185
      %p187 = pneg %p186
      // Predicated region
      $region9: #{sparse_layer.1} parent=5 // pred_check
        _
      $region10: #{sparse_layer.1} parent=5 // pred_check_branch
        %189 = sbr.rel (%p186) target = $region12
      $region11: #{sparse_layer.1} parent=5 // pred_region
        %s190 = ssub.s32 %s19, 1
      $region12: #{sparse_layer.1} parent=5 // pred_fallthru
        _
      %p191 = scmp.lt.s32.totalorder %s19, 18
      // Predicated region
      $region13: #{sparse_layer.1} parent=5 // pred_check
        %p192 = pneg %p191
      $region14: #{sparse_layer.1} parent=5 // pred_check_branch
        %194 = sbr.rel (%p192) target = $region16
      $region15: #{sparse_layer.1} parent=5 // pred_region
        // Predicated region
        $region17: #{sparse_layer.1} parent=15 // pred_check
          %p195 = pneg %p60
        $region18: #{sparse_layer.1} parent=15 // pred_check_branch
          %197 = sbr.rel (%p195) target = $region20
        $region19: #{sparse_layer.1} parent=15 // pred_region
          %s198 = sand.u32 %s50, 1
          %s199 = scalar_lea.sflag [#allocation4], %s198
          %s200 = sand.u32 %s50, 1
          %s201 = smul.addr %s200, 8
          %s202 = scalar_lea.vmem [#allocation3], %s201
          %s204 = ssub.s32 128, 128
          %205 = vsyncadd %s199, %s204
          %s206 = smul.addr %s26, 2
          %s207 = sadd.s32 %s28, %s206
          %s208 = smul.addr %s207, 128
          %s209 = scalar_lea.hbm %s0, %s208
          %s211 = sshll.u32 %s202, 4
          %s212 = int_to_ptr.vmem [resolvable:$true] %s211
          %214 = dma.hbm_to_vmem [thread:$0]  %s209, 128, %s212, %s199
        $region20: #{sparse_layer.1} parent=15 // pred_fallthru
          _
        // Predicated region
        $region21: #{sparse_layer.1} parent=15 // pred_check
          %p215 = pneg %p88
        $region22: #{sparse_layer.1} parent=15 // pred_check_branch
          %217 = sbr.rel (%p215) target = $region24
        $region23: #{sparse_layer.1} parent=15 // pred_region
          %s218 = sand.u32 %s19, 1
          %s219 = scalar_lea.sflag [#allocation7], %s218
          %s220 = sand.u32 %s78, 1
          %s221 = smul.addr %s220, 128
          %s222 = scalar_lea.vmem [#allocation6], %s221
          %s223 = smul.u32 16, %s27
          %s225 = ssub.s32 2048, 2048
          %226 = vsyncadd %s219, %s225
          %s227 = smul.addr %s223, 2
          %s228 = sadd.s32 %s28, %s227
          %s229 = smul.addr %s228, 128
          %s230 = scalar_lea.hbm %s1, %s229
          %s231 = sshll.u32 %s222, 4
          %s232 = int_to_ptr.vmem [resolvable:$true] %s231
          %237 = dma.hbm_to_vmem [thread:$0]  %s230, 2048, %s232, %s219, 256, 128, 8
        $region24: #{sparse_layer.1} parent=15 // pred_fallthru
          _
        // Predicated region
        $region25: #{sparse_layer.1} parent=15 // pred_check
          %p238 = pneg %p114
        $region26: #{sparse_layer.1} parent=15 // pred_check_branch
          %240 = sbr.rel (%p238) target = $region28
        $region27: #{sparse_layer.1} parent=15 // pred_region
          %p241 = scmp.lt.s32.totalorder %s27, 2
          %s242 = scalar_select %p241, %s27, 2
          %s243 = scalar_lea.vmem %s2, %s242
        $region28: #{sparse_layer.1} parent=15 // pred_fallthru
          _
        // Predicated region
        $region29: #{sparse_layer.1} parent=15 // pred_check
          %p244 = pneg %p142
        $region30: #{sparse_layer.1} parent=15 // pred_check_branch
          %246 = sbr.rel (%p244) target = $region32
        $region31: #{sparse_layer.1} parent=15 // pred_region
          %s247 = sand.u32 %s19, 1
          %s248 = scalar_lea.sflag [#allocation7], %s247
          %s249 = sand.u32 %s132, 1
          %s250 = smul.addr %s249, 8
          %s251 = scalar_lea.vmem [#allocation8], %s250
          %s253 = ssub.s32 128, 128
          %254 = vsyncadd %s248, %s253
          %s255 = smul.addr %s26, 3
          %s256 = sadd.s32 %s27, %s255
          %s257 = smul.addr %s256, 128
          %s258 = scalar_lea.hbm %s3, %s257
          %s260 = sshll.u32 %s251, 4
          %s261 = int_to_ptr.vmem [resolvable:$true] %s260
          %263 = dma.hbm_to_vmem [thread:$0]  %s258, 128, %s261, %s248
        $region32: #{sparse_layer.1} parent=15 // pred_fallthru
          _
      $region16: #{sparse_layer.1} parent=5 // pred_fallthru
        _
      %p264 = scmp.le.s32.totalorder 1, %s19
      %p265 = scmp.lt.s32.totalorder %s19, 19
      %p266 = pnand %p264, %p265
      %p267 = pneg %p266
      // Predicated region
      $region33: #{sparse_layer.1} parent=5 // pred_check
        _
      $region34: #{sparse_layer.1} parent=5 // pred_check_branch
        %269 = sbr.rel (%p266) target = $region36
      $region35: #{sparse_layer.1} parent=5 // pred_region
        %s270 = ssub.s32 %s19, 1
        %s271 = sand.u32 %s53, 1
        %s272 = scalar_lea.sflag [#allocation4], %s271
        %s273 = sand.u32 %s53, 1
        %s274 = smul.addr %s273, 8
        %s275 = scalar_lea.vmem [#allocation3], %s274
        // Predicated region
        $region37: #{sparse_layer.1} parent=35 // pred_check
          %p276 = pneg %p66
        $region38: #{sparse_layer.1} parent=35 // pred_check_branch
          %278 = sbr.rel (%p276) target = $region40
        $region39: #{sparse_layer.1} parent=35 // pred_region
          %279 = dma.done %s272, 128
        $region40: #{sparse_layer.1} parent=35 // pred_fallthru
          _
        %s280 = sand.u32 %s24, 1
        %s281 = scalar_lea.sflag [#allocation7], %s280
        %s282 = sand.u32 %s81, 1
        %s283 = smul.addr %s282, 128
        %s284 = scalar_lea.vmem [#allocation6], %s283
        // Predicated region
        $region41: #{sparse_layer.1} parent=35 // pred_check
          %p285 = pneg %p94
        $region42: #{sparse_layer.1} parent=35 // pred_check_branch
          %287 = sbr.rel (%p285) target = $region44
        $region43: #{sparse_layer.1} parent=35 // pred_region
          %288 = dma.done %s281, 2048
        $region44: #{sparse_layer.1} parent=35 // pred_fallthru
          _
        %s289 = sand.u32 %s24, 1
        %s290 = scalar_lea.sflag [#allocation7], %s289
        %s291 = sand.u32 %s135, 1
        %s292 = smul.addr %s291, 8
        %s293 = scalar_lea.vmem [#allocation8], %s292
        // Predicated region
        $region45: #{sparse_layer.1} parent=35 // pred_check
          %p294 = pneg %p148
        $region46: #{sparse_layer.1} parent=35 // pred_check_branch
          %296 = sbr.rel (%p294) target = $region48
        $region47: #{sparse_layer.1} parent=35 // pred_region
          %297 = dma.done %s290, 128
        $region48: #{sparse_layer.1} parent=35 // pred_fallthru
          _
        %s298 = sand.u32 %s53, 1
        %s299 = scalar_lea.sflag [#allocation4], %s298
        %s300 = sand.u32 %s53, 1
        %s301 = smul.addr %s300, 8
        %s302 = scalar_lea.vmem [#allocation3], %s301
        %p303 = pneg %p66
        %p304 = pneg %p63
        %s305 = sand.u32 %s24, 1
        %s306 = scalar_lea.sflag [#allocation7], %s305
        %s307 = sand.u32 %s81, 1
        %s308 = smul.addr %s307, 128
        %s309 = scalar_lea.vmem [#allocation6], %s308
        %p310 = pneg %p94
        %p311 = pneg %p91
        %p312 = scmp.lt.s32.totalorder %s30, 2
        %s313 = scalar_select %p312, %s30, 2
        %s314 = scalar_lea.vmem %s2, %s313
        %p315 = pneg %p120
        %p316 = pneg %p117
        %s317 = sand.u32 %s24, 1
        %s318 = scalar_lea.sflag [#allocation7], %s317
        %s319 = sand.u32 %s135, 1
        %s320 = smul.addr %s319, 8
        %s321 = scalar_lea.vmem [#allocation8], %s320
        %p322 = pneg %p148
        %p323 = pneg %p145
        %p324 = pneg %p176
        %p325 = pneg %p173
        %s326 = sand.u32 %s163, 1
        %s327 = scalar_lea.sflag [#allocation5], %s326
        %s328 = sand.u32 %s163, 1
        %s329 = smul.addr %s328, 8
        %s330 = scalar_lea.vmem [#allocation9], %s329
        %s331 = smul.u32 16, %s30
        %p332 = scmp.lt.s32.totalorder %s30, 2
        %s333 = scalar_select %p332, %s30, 2
        %s334 = scalar_lea.vmem %s2, %s333
        %p335 = scmp.eq.s32.totalorder %s31, 0
        // Predicated region
        $region49: #{sparse_layer.1} parent=35 // pred_check
          %p336 = pneg %p335
        $region50: #{sparse_layer.1} parent=35 // pred_check_branch
          %338 = sbr.rel (%p336) target = $region52
        $region51: #{sparse_layer.1} parent=35 // pred_region
          %339 = vst [vmem:[#allocation2] sm:$0xff] 0.0
        $region52: #{sparse_layer.1} parent=35 // pred_fallthru
          _
        %v340 = vld [vmem:[#allocation2] sm:$0xff]
        %v341 = vld [vmem:[%s275] sm:$0xff]
        %v342 = vld [vmem:[%s284] sm:$0xff]
        %v343 = vld [vmem:[%s284 + $0x8] sm:$0xff]
        %v344 = vld [vmem:[%s284 + $0x10] sm:$0xff]
        %v345 = vld [vmem:[%s284 + $0x18] sm:$0xff]
        %v346 = vld [vmem:[%s284 + $0x20] sm:$0xff]
        %v347 = vld [vmem:[%s284 + $0x28] sm:$0xff]
        %v348 = vld [vmem:[%s284 + $0x30] sm:$0xff]
        %v349 = vld [vmem:[%s284 + $0x38] sm:$0xff]
        %v350 = vld [vmem:[%s284 + $0x40] sm:$0xff]
        %v351 = vld [vmem:[%s284 + $0x48] sm:$0xff]
        %v352 = vld [vmem:[%s284 + $0x50] sm:$0xff]
        %v353 = vld [vmem:[%s284 + $0x58] sm:$0xff]
        %v354 = vld [vmem:[%s284 + $0x60] sm:$0xff]
        %v355 = vld [vmem:[%s284 + $0x68] sm:$0xff]
        %v356 = vld [vmem:[%s284 + $0x70] sm:$0xff]
        %v357 = vld [vmem:[%s284 + $0x78] sm:$0xff]
        %358 = vmatprep.subr.mxu0 0.0
        %359 = vmatpush1.xpose.msra.mxu0 %v357
        %360 = vmatprep.subr.mxu0 0.0
        %361 = vmatpush1.xpose.msra.mxu0 %v356
        %362 = vmatprep.subr.mxu0 0.0
        %363 = vmatpush1.xpose.msra.mxu0 %v355
        %364 = vmatprep.subr.mxu0 0.0
        %365 = vmatpush1.xpose.msra.mxu0 %v354
        %366 = vmatprep.subr.mxu0 0.0
        %367 = vmatpush1.xpose.msra.mxu0 %v353
        %368 = vmatprep.subr.mxu0 0.0
        %369 = vmatpush1.xpose.msra.mxu0 %v352
        %370 = vmatprep.subr.mxu0 0.0
        %371 = vmatpush1.xpose.msra.mxu0 %v351
        %372 = vmatprep.subr.mxu0 0.0
        %373 = vmatpush1.xpose.msra.mxu0 %v350
        %374 = vmatprep.subr.mxu0 0.0
        %375 = vmatpush1.xpose.msra.mxu0 %v349
        %376 = vmatprep.subr.mxu0 0.0
        %377 = vmatpush1.xpose.msra.mxu0 %v348
        %378 = vmatprep.subr.mxu0 0.0
        %379 = vmatpush1.xpose.msra.mxu0 %v347
        %380 = vmatprep.subr.mxu0 0.0
        %381 = vmatpush1.xpose.msra.mxu0 %v346
        %382 = vmatprep.subr.mxu0 0.0
        %383 = vmatpush1.xpose.msra.mxu0 %v345
        %384 = vmatprep.subr.mxu0 0.0
        %385 = vmatpush1.xpose.msra.mxu0 %v344
        %386 = vmatprep.subr.mxu0 0.0
        %387 = vmatpush1.xpose.msra.mxu0 %v343
        %388 = vmatprep.subr.mxu0 0.0
        %389 = vmatpush1.xpose.msra.mxu0 %v342
        %390 = vmatprep.subr.mxu0 0.0
        %391 = vmatpush2.xpose.msra.mxu0 0.0
        %392 = vmatprep.subr.mxu0 0.0
        %393 = vmatpush2.xpose.msra.mxu0 0.0
        %394 = vmatprep.subr.mxu0 0.0
        %395 = vmatpush2.xpose.msra.mxu0 0.0
        %396 = vmatprep.subr.mxu0 0.0
        %397 = vmatpush2.xpose.msra.mxu0 0.0
        %398 = vmatprep.subr.mxu0 0.0
        %399 = vmatpush2.xpose.msra.mxu0 0.0
        %400 = vmatprep.subr.mxu0 0.0
        %401 = vmatpush2.xpose.msra.mxu0 0.0
        %402 = vmatprep.subr.mxu0 0.0
        %403 = vmatpush2.xpose.msra.mxu0 0.0
        %404 = vmatprep.subr.mxu0 0.0
        %405 = vmatpush2.xpose.msra.mxu0 0.0
        %406 = vmatprep.subr.mxu0 0.0
        %407 = vmatpush2.xpose.msra.mxu0 0.0
        %408 = vmatprep.subr.mxu0 0.0
        %409 = vmatpush2.xpose.msra.mxu0 0.0
        %410 = vmatprep.subr.mxu0 0.0
        %411 = vmatpush2.xpose.msra.mxu0 0.0
        %412 = vmatprep.subr.mxu0 0.0
        %413 = vmatpush2.xpose.msra.mxu0 0.0
        %414 = vmatprep.subr.mxu0 0.0
        %415 = vmatpush2.xpose.msra.mxu0 0.0
        %416 = vmatprep.subr.mxu0 0.0
        %417 = vmatpush2.xpose.msra.mxu0 0.0
        %418 = vmatprep.subr.mxu0 0.0
        %419 = vmatpush2.xpose.msra.mxu0 0.0
        %420 = vmatprep.subr.mxu0 0.0
        %421 = vmatpush2.xpose.msra.mxu0 0.0
        %422 = vmatprep.mubr.f32.mxu0 0.0
        %423 = vmatmul.mubr.f32.gmra.mxu0 %v341
        %v424 = vpop.f32.mrf.mxu0
        %v425 = vadd.f32 0.0, %v424
        %v426 = vpop.f32.mrf.mxu0
        %427 = vdwg.mxu0
        %v428 = vadd.f32 %v340, %v425
        %429 = vst [vmem:[#allocation2] sm:$0xff] %v428
        %p430 = scmp.eq.s32.totalorder %s31, 1
        // Predicated region
        $region53: #{sparse_layer.1} parent=35 // pred_check
          %p431 = pneg %p430
        $region54: #{sparse_layer.1} parent=35 // pred_check_branch
          %433 = sbr.rel (%p431) target = $region56
        $region55: #{sparse_layer.1} parent=35 // pred_region
          %v434 = vld [vmem:[#allocation2] sm:$0xff]
          %v435 = vld [vmem:[%s334] sm:$0x1]
          %v437 = vlaneseq
          %v438 = vshrl.u32 %v437, 7
          %v439 = vsub.s32 0, %v438
          %v440 = vrot.slane %v435, %v439
          %v442 = vadd.f32 %v434, %v440
          %v443 = vld [vmem:[%s293] sm:$0xff]
          %v444 = vadd.f32 %v442, %v443
          %v445 = vmax.f32 %v444, 0.0
          %446 = vst [vmem:[%s330] sm:$0xff] %v445
        $region56: #{sparse_layer.1} parent=35 // pred_fallthru
          _
        %s447 = sand.u32 %s163, 1
        %s448 = scalar_lea.sflag [#allocation5], %s447
        %s449 = sand.u32 %s163, 1
        %s450 = smul.addr %s449, 8
        %s451 = scalar_lea.vmem [#allocation9], %s450
        // Predicated region
        $region57: #{sparse_layer.1} parent=35 // pred_check
          %p452 = pneg %p173
        $region58: #{sparse_layer.1} parent=35 // pred_check_branch
          %454 = sbr.rel (%p452) target = $region60
        $region59: #{sparse_layer.1} parent=35 // pred_region
          %s456 = ssub.s32 128, 128
          %457 = vsyncadd %s448, %s456
          %s458 = smul.addr %s29, 3
          %s459 = sadd.s32 %s30, %s458
          %s460 = smul.addr %s459, 128
          %s461 = scalar_lea.hbm %s4, %s460
          %s463 = sshll.u32 %s451, 4
          %s464 = int_to_ptr.vmem [resolvable:$true] %s463
          %466 = dma.vmem_to_hbm [thread:$0]  %s464, 128, %s461, %s448
        $region60: #{sparse_layer.1} parent=35 // pred_fallthru
          _
      $region36: #{sparse_layer.1} parent=5 // pred_fallthru
        _
      %p467 = scmp.le.s32.totalorder 2, %s19
      // Predicated region
      $region61: #{sparse_layer.1} parent=5 // pred_check
        %p468 = pneg %p467
      $region62: #{sparse_layer.1} parent=5 // pred_check_branch
        %470 = sbr.rel (%p468) target = $region64
      $region63: #{sparse_layer.1} parent=5 // pred_region
        %s471 = ssub.s32 %s19, 2
        // Predicated region
        $region65: #{sparse_layer.1} parent=63 // pred_check
          %p472 = pneg %p179
        $region66: #{sparse_layer.1} parent=63 // pred_check_branch
          %474 = sbr.rel (%p472) target = $region68
        $region67: #{sparse_layer.1} parent=63 // pred_region
          %s475 = sand.u32 %s164, 1
          %s476 = scalar_lea.sflag [#allocation5], %s475
          %s477 = sand.u32 %s164, 1
          %s478 = smul.addr %s477, 8
          %s479 = scalar_lea.vmem [#allocation9], %s478
          %480 = dma.done %s476, 128
        $region68: #{sparse_layer.1} parent=63 // pred_fallthru
          _
      $region64: #{sparse_layer.1} parent=5 // pred_fallthru
        _
    $region6: #{sparse_layer.1} parent=1 // loop_footer
      %s23 = sadd.s32 1, %s19
    $region7: #{sparse_layer.1} parent=1 // loop_footer_branch
      %18 = sbr.rel target = $region3
    $region8: #{sparse_layer.1} parent=1 // loop_exit
      _
    %481 = vsyncpa [#allocation4], 1
    %s482 = scalar_lea.sflag [#allocation4], 1
    %483 = vsyncpa %s482, 1
    %484 = vsyncpa [#allocation7], 1
    %s485 = scalar_lea.sflag [#allocation7], 1
    %486 = vsyncpa %s485, 1
    %487 = vsyncpa [#allocation5], 1
    %s488 = scalar_lea.sflag [#allocation5], 1
    %489 = vsyncpa %s488, 1

</llo_original>
